<compile_context>
chip_gen: v5e
topology: v5e:2x2
jax: 0.10.0
libtpu: 0.0.40
codegen_flags: <defaults>
</compile_context>

<pallas_src>
import functools

import jax
import jax.numpy as jnp
from jax import lax
from jax.experimental import pallas as pl
from jax.experimental.pallas import tpu as pltpu

_LANE = 128
_BLOCK_BYTES = 4 * 1024 * 1024        # per-operand streaming block (~4 MiB)
_FUSED_SLAB_BYTES = 6 * 1024 * 1024   # fused path if C*HW*elt <= this (4x <= 24 MiB)
_VMEM_LIMIT = 32 * 1024 * 1024        # scoped VMEM cap (safe on v5e/v6e/v7x)


def _round_up(a, b):
    return (a + b - 1) // b * b


# ----------------------------- fused single-pass ------------------------------

def _fused_ca_kernel(x_ref, w1_ref, b1_ref, w2_ref, b2_ref, o_ref, *, inv_hw):
    # x_ref/o_ref: (1, C, HW); w1: (C8, C); b1: (C8, 1); w2: (C, C8); b2: (C, 1).
    x = x_ref[0]                                                     # (C, HW)
    pooled = jnp.sum(x, axis=-1, dtype=jnp.float32) * inv_hw         # (C,) f32
    # 1x1 conv (C -> C//8) + ReLU, as broadcast-mul + lane reduce (tiny).
    h = jnp.maximum(
        jnp.sum(w1_ref[...] * pooled[None, :], axis=-1) + b1_ref[...][:, 0],
        0.0)                                                         # (C8,)
    # 1x1 conv (C//8 -> C) + sigmoid; keepdims -> (C, 1) channel-gate column.
    g = jax.nn.sigmoid(
        jnp.sum(w2_ref[...] * h[None, :], axis=-1, keepdims=True) + b2_ref[...])
    o_ref[0] = (x * g.astype(x.dtype)).astype(o_ref.dtype)


def _fused_ca(x2, w1, b1, w2, b2, inv_hw):
    N, C, HW = x2.shape
    C8 = w1.shape[0]
    elt = x2.dtype.itemsize
    return pl.pallas_call(
        functools.partial(_fused_ca_kernel, inv_hw=inv_hw),
        out_shape=jax.ShapeDtypeStruct((N, C, HW), x2.dtype),
        grid_spec=pltpu.PrefetchScalarGridSpec(
            num_scalar_prefetch=0,
            grid=(N,),
            in_specs=[
                pl.BlockSpec((1, C, HW), lambda n: (n, 0, 0)),
                pl.BlockSpec((C8, C), lambda n: (0, 0)),
                pl.BlockSpec((C8, 1), lambda n: (0, 0)),
                pl.BlockSpec((C, C8), lambda n: (0, 0)),
                pl.BlockSpec((C, 1), lambda n: (0, 0)),
            ],
            out_specs=pl.BlockSpec((1, C, HW), lambda n: (n, 0, 0)),
        ),
        compiler_params=pltpu.CompilerParams(
            dimension_semantics=("parallel",),
            vmem_limit_bytes=_VMEM_LIMIT),
        cost_estimate=pl.CostEstimate(
            flops=2 * N * C * HW,
            transcendentals=N * C,
            bytes_accessed=2 * N * C * HW * elt),
    )(x2, w1, b1, w2, b2)


# --------------------------- streaming two-pass path --------------------------

def _pool_sum_kernel(x_ref, sum_ref, *, hw, tile):
    # x_ref: (1, C, tile); sum_ref: (1, C) f32 accumulator that stays resident
    # across the HW-tile (reduction) grid axis.
    @pl.when(pl.program_id(1) == 0)
    def _():
        sum_ref[...] = jnp.zeros_like(sum_ref)

    x = x_ref[0]                                                     # (C, tile)
    if hw % tile != 0:
        # The last block hangs off the end of the array: mask its garbage lanes.
        idx = pl.program_id(1) * tile + lax.broadcasted_iota(jnp.int32, x.shape, 1)
        x = jnp.where(idx < hw, x, jnp.zeros_like(x))
    sum_ref[...] += jnp.sum(x, axis=-1, dtype=jnp.float32)[None, :]


def _scale_kernel(x_ref, g_ref, o_ref):
    # x_ref/o_ref: (1, C, tile); g_ref: (1, C, 1) f32 channel gates.
    # Pure load -> per-channel scale -> store stream (gate cast to x dtype so no
    # full-tile f32 staging copy for bf16 activations).
    g = g_ref[0].astype(x_ref.dtype)                                 # (C, 1)
    o_ref[0] = (x_ref[0] * g).astype(o_ref.dtype)


def ca_layer(x, w1, b1, w2, b2):
    """x: (N, C, H, W); w1: (C//8, C); b1: (C//8, 1); w2: (C, C//8); b2: (C, 1)."""
    N, C, H, W = x.shape
    HW = H * W
    C8 = w1.shape[0]
    elt = x.dtype.itemsize

    x2 = x.reshape(N, C, HW)                      # contiguous reshape: free
    w1f = w1.astype(jnp.float32).reshape(C8, C)
    b1f = b1.astype(jnp.float32).reshape(C8, 1)
    w2f = w2.astype(jnp.float32).reshape(C, C8)
    b2f = b2.astype(jnp.float32).reshape(C, 1)

    # ---- fused single-pass path: whole (C, HW) slab fits VMEM comfortably ----
    if C * HW * elt <= _FUSED_SLAB_BYTES:
        out = _fused_ca(x2, w1f, b1f, w2f, b2f, 1.0 / HW)
        return out.reshape(N, C, H, W)

    # ---- streaming two-pass path for large spatial slabs ----
    # Lane-dense spatial tile sized to ~_BLOCK_BYTES to amortize per-step cost
    # (pass 2 footprint: 2*in + 2*out = 4 blocks <= 16 MiB <= _VMEM_LIMIT).
    # TODO(synk): optional leading size-2 parallel grid axis would split pass 1
    # across both v7x TensorCores when N == 1.
    tile = max(_LANE, (_BLOCK_BYTES // (C * elt)) // _LANE * _LANE)
    tile = min(tile, _round_up(HW, _LANE))
    num_tiles = pl.cdiv(HW, tile)

    # Pass 1: global channel sums (avg-pool numerator), f32 accumulation.
    sums = pl.pallas_call(
        functools.partial(_pool_sum_kernel, hw=HW, tile=tile),
        out_shape=jax.ShapeDtypeStruct((N, C), jnp.float32),
        grid_spec=pltpu.PrefetchScalarGridSpec(
            num_scalar_prefetch=0,
            grid=(N, num_tiles),
            in_specs=[pl.BlockSpec((1, C, tile), lambda n, t: (n, 0, t))],
            out_specs=pl.BlockSpec((1, C), lambda n, t: (n, 0)),
        ),
        compiler_params=pltpu.CompilerParams(
            dimension_semantics=("parallel", "arbitrary"),
            vmem_limit_bytes=_VMEM_LIMIT),
        cost_estimate=pl.CostEstimate(
            flops=N * C * HW,
            transcendentals=0,
            bytes_accessed=N * C * HW * elt + N * C * 4),
    )(x2)

    # Tiny FC + sigmoid in plain XLA (O(N*C^2/8) FLOPs: noise), batched over N.
    pooled = sums * (1.0 / HW)                                       # (N, C) f32
    h = jnp.maximum(pooled @ w1f.T + b1f.reshape(1, -1), 0.0)
    gates = jax.nn.sigmoid(h @ w2f.T + b2f.reshape(1, -1))           # (N, C) f32

    # Pass 2: pure streaming x * gate, fully parallel grid (ragged tail writes
    # of the last block are clipped by Pallas, so no mask needed here).
    out = pl.pallas_call(
        _scale_kernel,
        out_shape=jax.ShapeDtypeStruct((N, C, HW), x.dtype),
        grid_spec=pltpu.PrefetchScalarGridSpec(
            num_scalar_prefetch=0,
            grid=(N, num_tiles),
            in_specs=[
                pl.BlockSpec((1, C, tile), lambda n, t: (n, 0, t)),
                pl.BlockSpec((1, C, 1), lambda n, t: (n, 0, 0)),
            ],
            out_specs=pl.BlockSpec((1, C, tile), lambda n, t: (n, 0, t)),
        ),
        compiler_params=pltpu.CompilerParams(
            dimension_semantics=("parallel", "parallel"),
            vmem_limit_bytes=_VMEM_LIMIT),
        cost_estimate=pl.CostEstimate(
            flops=N * C * HW,
            transcendentals=0,
            bytes_accessed=2 * N * C * HW * elt + N * C * 4),
    )(x2, gates[:, :, None])

    return out.reshape(N, C, H, W)


def ca_layer_ref(x, w1, b1, w2, b2):
    # Pure-JAX reference of the PyTorch forward (NCHW).
    y = jnp.mean(x, axis=(2, 3))                             # (N, C)
    h = jnp.maximum(y @ w1.T + b1[:, 0], 0.0)                # (N, C//8)
    s = jax.nn.sigmoid(h @ w2.T + b2[:, 0])                  # (N, C)
    return x * s[:, :, None, None]


if __name__ == "__main__":
    key = jax.random.PRNGKey(0)
    kx, k1, k2, k3, k4 = jax.random.split(key, 5)

    N, C, H, W = 2, 32, 16, 16          # C must be a multiple of 8 (C // 8)
    C8 = C // 8

    x = jax.random.normal(kx, (N, C, H, W), dtype=jnp.float32)
    # Conv2d 1x1 weights squeezed to 2D, biases kept as (out, 1).
    w1 = 0.1 * jax.random.normal(k1, (C8, C), dtype=jnp.float32)   # Conv2d(C, C//8, 1).weight
    b1 = 0.1 * jax.random.normal(k2, (C8, 1), dtype=jnp.float32)   # Conv2d(C, C//8, 1).bias
    w2 = 0.1 * jax.random.normal(k3, (C, C8), dtype=jnp.float32)   # Conv2d(C//8, C, 1).weight
    b2 = 0.1 * jax.random.normal(k4, (C, 1), dtype=jnp.float32)    # Conv2d(C//8, C, 1).bias

    def check(xa, atol, rtol):
        out = jax.block_until_ready(ca_layer(xa, w1, b1, w2, b2))
        assert out.shape == xa.shape and out.dtype == xa.dtype
        ref = ca_layer_ref(xa.astype(jnp.float32), w1, b1, w2, b2)
        assert jnp.allclose(out.astype(jnp.float32), ref, atol=atol, rtol=rtol), \
            f"mismatch vs JAX reference for shape {xa.shape} dtype {xa.dtype}"

    # Fused single-pass path (per-image slab fits VMEM).
    check(x, 1e-5, 1e-5)                                                       # 16x16
    check(jax.random.normal(kx, (N, C, 7, 7), dtype=jnp.float32), 1e-5, 1e-5)  # odd HW
    check(jax.random.normal(kx, (N, C, 24, 24), dtype=jnp.float32), 1e-5, 1e-5)
    check(x.astype(jnp.bfloat16), 3e-2, 3e-2)                                  # bf16

    # Streaming two-pass path (slab above fused threshold): big-tile reduction
    # with masked ragged last block + fully parallel scale pass.
    check(jax.random.normal(kx, (2, C, 224, 224), dtype=jnp.float32), 1e-4, 1e-4)
    check(jax.random.normal(kx, (1, C, 320, 320), dtype=jnp.float32)
          .astype(jnp.bfloat16), 3e-2, 3e-2)

    print("KERNEL_OK")
</pallas_src>

<mosaic_0001>
module attributes {stable_mosaic.version = 11 : i64} {
  func.func @_fused_ca_kernel(%arg0: i32, %arg1: memref<1x32x256xf32, #tpu.memory_space<vmem>>, %arg2: memref<4x32xf32, #tpu.memory_space<vmem>>, %arg3: memref<4x1xf32, #tpu.memory_space<vmem>>, %arg4: memref<32x4xf32, #tpu.memory_space<vmem>>, %arg5: memref<32x1xf32, #tpu.memory_space<vmem>>, %arg6: memref<1x32x256xf32, #tpu.memory_space<vmem>>) attributes {dimension_semantics = [#tpu.dimension_semantics<parallel>], iteration_bounds = array<i64: 2>, scalar_prefetch = 0 : i64, scratch_operands = 0 : i64, tpu.core_type = #tpu.core_type<tc>, window_params = [{transform_indices = @transform_0, window_bounds = array<i64: 1, 32, 256>}, {pipeline_mode = #tpu.pipeline_mode<synchronous>, transform_indices = @transform_1, window_bounds = array<i64: 4, 32>}, {pipeline_mode = #tpu.pipeline_mode<synchronous>, transform_indices = @transform_2, window_bounds = array<i64: 4, 1>}, {pipeline_mode = #tpu.pipeline_mode<synchronous>, transform_indices = @transform_3, window_bounds = array<i64: 32, 4>}, {pipeline_mode = #tpu.pipeline_mode<synchronous>, transform_indices = @transform_4, window_bounds = array<i64: 32, 1>}, {transform_indices = @transform_5, window_bounds = array<i64: 1, 32, 256>}]} {
    %c0 = arith.constant 0 : index
    %c0_0 = arith.constant 0 : index
    %c0_1 = arith.constant 0 : index
    %0 = vector.load %arg1[%c0, %c0_0, %c0_1] : memref<1x32x256xf32, #tpu.memory_space<vmem>>, vector<1x32x256xf32>
    %1 = vector.shape_cast %0 : vector<1x32x256xf32> to vector<32x256xf32>
    %cst = arith.constant dense<0.000000e+00> : vector<32xf32>
    %2 = vector.multi_reduction <add>, %1, %cst [1] : vector<32x256xf32> to vector<32xf32>
    %cst_2 = arith.constant 3.906250e-03 : f32
    %3 = vector.broadcast %cst_2 : f32 to vector<32xf32>
    %4 = arith.mulf %2, %3 : vector<32xf32>
    %c0_3 = arith.constant 0 : index
    %c0_4 = arith.constant 0 : index
    %5 = vector.load %arg2[%c0_3, %c0_4] : memref<4x32xf32, #tpu.memory_space<vmem>>, vector<4x32xf32>
    %6 = vector.shape_cast %4 : vector<32xf32> to vector<1x32xf32>
    %7 = vector.broadcast %6 : vector<1x32xf32> to vector<4x32xf32>
    %8 = arith.mulf %5, %7 : vector<4x32xf32>
    %cst_5 = arith.constant dense<0.000000e+00> : vector<4xf32>
    %9 = vector.multi_reduction <add>, %8, %cst_5 [1] : vector<4x32xf32> to vector<4xf32>
    %c0_6 = arith.constant 0 : index
    %c0_7 = arith.constant 0 : index
    %10 = vector.load %arg3[%c0_6, %c0_7] : memref<4x1xf32, #tpu.memory_space<vmem>>, vector<4x1xf32>
    %11 = vector.shape_cast %10 : vector<4x1xf32> to vector<4xf32>
    %12 = arith.addf %9, %11 : vector<4xf32>
    %cst_8 = arith.constant 0.000000e+00 : f32
    %13 = vector.broadcast %cst_8 : f32 to vector<4xf32>
    %14 = arith.maximumf %12, %13 : vector<4xf32>
    %c0_9 = arith.constant 0 : index
    %c0_10 = arith.constant 0 : index
    %15 = vector.load %arg4[%c0_9, %c0_10] : memref<32x4xf32, #tpu.memory_space<vmem>>, vector<32x4xf32>
    %16 = vector.shape_cast %14 : vector<4xf32> to vector<1x4xf32>
    %17 = vector.broadcast %16 : vector<1x4xf32> to vector<32x4xf32>
    %18 = arith.mulf %15, %17 : vector<32x4xf32>
    %cst_11 = arith.constant dense<0.000000e+00> : vector<32xf32>
    %19 = vector.multi_reduction <add>, %18, %cst_11 [1] : vector<32x4xf32> to vector<32xf32>
    %20 = vector.shape_cast %19 : vector<32xf32> to vector<32x1xf32>
    %c0_12 = arith.constant 0 : index
    %c0_13 = arith.constant 0 : index
    %21 = vector.load %arg5[%c0_12, %c0_13] : memref<32x1xf32, #tpu.memory_space<vmem>>, vector<32x1xf32>
    %22 = arith.addf %20, %21 : vector<32x1xf32>
    %23 = arith.negf %22 : vector<32x1xf32>
    %24 = math.exp %23 : vector<32x1xf32>
    %cst_14 = arith.constant 1.000000e+00 : f32
    %25 = vector.broadcast %cst_14 : f32 to vector<32x1xf32>
    %26 = arith.addf %25, %24 : vector<32x1xf32>
    %27 = arith.divf %25, %26 : vector<32x1xf32>
    %28 = vector.broadcast %27 : vector<32x1xf32> to vector<32x256xf32>
    %29 = arith.mulf %1, %28 : vector<32x256xf32>
    %c0_15 = arith.constant 0 : index
    %c0_16 = arith.constant 0 : index
    %c0_17 = arith.constant 0 : index
    %30 = vector.load %arg6[%c0_15, %c0_16, %c0_17] : memref<1x32x256xf32, #tpu.memory_space<vmem>>, vector<1x32x256xf32>
    %31 = vector.shape_cast %30 : vector<1x32x256xf32> to vector<32x256xf32>
    %32 = vector.shape_cast %29 : vector<32x256xf32> to vector<1x32x256xf32>
    tpu.vector_store %arg6[%c0_15, %c0_16, %c0_17], %32 {strides = array<i32>} : memref<1x32x256xf32, #tpu.memory_space<vmem>>, vector<1x32x256xf32>,
    return
  }
  func.func @transform_0(%arg0: i32) -> (i32, i32, i32) {
    %c0_i32 = arith.constant 0 : i32
    %c0_i32_0 = arith.constant 0 : i32
    %c0_i32_1 = arith.constant 0 : i32
    return %arg0, %c0_i32, %c0_i32_0 : i32, i32, i32
  }
  func.func @transform_1(%arg0: i32) -> (i32, i32) {
    %c0_i32 = arith.constant 0 : i32
    %c0_i32_0 = arith.constant 0 : i32
    %c0_i32_1 = arith.constant 0 : i32
    return %c0_i32, %c0_i32_0 : i32, i32
  }
  func.func @transform_2(%arg0: i32) -> (i32, i32) {
    %c0_i32 = arith.constant 0 : i32
    %c0_i32_0 = arith.constant 0 : i32
    %c0_i32_1 = arith.constant 0 : i32
    return %c0_i32, %c0_i32_0 : i32, i32
  }
  func.func @transform_3(%arg0: i32) -> (i32, i32) {
    %c0_i32 = arith.constant 0 : i32
    %c0_i32_0 = arith.constant 0 : i32
    %c0_i32_1 = arith.constant 0 : i32
    return %c0_i32, %c0_i32_0 : i32, i32
  }
  func.func @transform_4(%arg0: i32) -> (i32, i32) {
    %c0_i32 = arith.constant 0 : i32
    %c0_i32_0 = arith.constant 0 : i32
    %c0_i32_1 = arith.constant 0 : i32
    return %c0_i32, %c0_i32_0 : i32, i32
  }
  func.func @transform_5(%arg0: i32) -> (i32, i32, i32) {
    %c0_i32 = arith.constant 0 : i32
    %c0_i32_0 = arith.constant 0 : i32
    %c0_i32_1 = arith.constant 0 : i32
    return %arg0, %c0_i32, %c0_i32_0 : i32, i32, i32
  }
}

</mosaic_0001>

<llo_original>
// kernel: tpu_custom_call.1
$region0: #{tpu_custom_call.1}
  #allocation0 [shape = 'u32[]', space=smem, size = 0x4, offset = 0x4, fixed_abs, tag = 'smem constant byte address 0x4 - core index']
  #allocation1 [shape = 'u32[72,128]{1,0:T(1,128)}', space=vmem, size = 0x9000, scoped, tag = 'internal scratch']
  %s0 = inlined_call_operand.hbm [shape: f32[2,32,256], index: 0, kind: input, shape index: {}]
  %s1 = inlined_call_operand.vmem [shape: f32[4,32], index: 1, kind: input, shape index: {}]
  %s2 = inlined_call_operand.vmem [shape: f32[4,1], index: 2, kind: input, shape index: {}]
  %s3 = inlined_call_operand.vmem [shape: f32[32,4], index: 3, kind: input, shape index: {}]
  %s4 = inlined_call_operand.vmem [shape: f32[32,1], index: 4, kind: input, shape index: {}]
  %s5 = inlined_call_operand.hbm [shape: f32[2,32,256], index: 5, kind: output, shape index: {}]
  %s6 = sld [smem:[#allocation0]]
  $region57: #{tpu_custom_call.1} parent=0
    _
  %s8 = ssub.s32 1, %s6
  %s9 = scalar_select 0, %s8, %s6
  $region1: #{tpu_custom_call.1} parent=0
    #allocation2 [shape = 'u8[65536]{0}', space=vmem, size = 0x10000, scoped, tag = 'input window, operand 0']
    #allocation3 [shape = 's32[2]{0}', space=sflag, size = 0x8, scoped, tag = 'scoped memory for tpu_custom_call.1']
    #allocation4 [shape = 's32[2]{0}', space=sflag, size = 0x8, scoped, tag = 'scoped memory for tpu_custom_call.1']
    #allocation5 [shape = 'u8[65536]{0}', space=vmem, size = 0x10000, scoped, tag = 'output window, operand 0']
    %10 = vsyncpa [#allocation3], 0
    %s11 = scalar_lea.sflag [#allocation3], 1
    %12 = vsyncpa %s11, 0
    %13 = vsyncpa [#allocation4], 0
    %s14 = scalar_lea.sflag [#allocation4], 1
    %15 = vsyncpa %s14, 0
    loop: start=0, step=1, limit=4
    $region2: #{tpu_custom_call.1} parent=1 // loop_pre_header
      _
    $region3: #{tpu_custom_call.1} parent=1 // loop_header
      %s17 = sphi 0, %s21
      %p18 = scmp.ge.s32.totalorder %s17, 4
      %s27 = sphi 0, %s29
      %s30 = sphi 0, %s27
      %s31 = sphi 0, %s30
      %s47 = sphi 0, %s31
      %s51 = sphi 0, %s51
      %s53 = sphi 0, %s51
      %s54 = sphi 0, %s53
      %s68 = sphi 0, %s54
      %s72 = sphi 0, %s72
      %s74 = sphi 0, %s72
      %s75 = sphi 0, %s74
      %s89 = sphi 0, %s75
      %s93 = sphi 0, %s93
      %s95 = sphi 0, %s93
      %s96 = sphi 0, %s95
      %s110 = sphi 0, %s96
      %s114 = sphi 0, %s114
      %s116 = sphi 0, %s114
      %s117 = sphi 0, %s116
      %s131 = sphi 0, %s117
      %s137 = sphi 0, %s139
      %s140 = sphi 0, %s137
      %s141 = sphi 0, %s140
      %s157 = sphi 0, %s141
    $region4: #{tpu_custom_call.1} parent=1 // loop_header_branch
      %20 = sbr.rel (%p18) target = $region8
    $region5: #{tpu_custom_call.1} parent=1 // loop_body
      %s22 = ssub.s32 %s17, 1
      %s23 = ssub.s32 %s17, 2
      %s24 = sadd.s32 %s17, 1
      %s25 = ssub.s32 %s17, %s24
      %p26 = scmp.eq.s32.totalorder %s25, 0
      %s28 = sadd.s32 %s27, 1
      %s29 = scalar_select %p26, %s27, %s28
      %p32 = pneg %p26
      %p33 = scmp.eq.s32.totalorder %s17, 1
      %p34 = por %p32, %p33
      %p35 = scmp.ne.s32.totalorder %s27, %s30
      %p36 = scmp.eq.s32.totalorder %s17, 0
      %p37 = por %p35, %p36
      %p38 = scmp.ne.s32.totalorder %s27, %s30
      %p39 = scmp.eq.s32.totalorder %s22, 1
      %p40 = por %p38, %p39
      %p41 = scmp.ne.s32.totalorder %s30, %s31
      %p42 = scmp.eq.s32.totalorder %s22, 0
      %p43 = por %p41, %p42
      %p44 = scmp.ne.s32.totalorder %s30, %s31
      %p45 = scmp.eq.s32.totalorder %s23, 1
      %p46 = por %p44, %p45
      %p48 = scmp.ne.s32.totalorder %s31, %s47
      %p49 = scmp.eq.s32.totalorder %s23, 0
      %p50 = por %p48, %p49
      %s52 = sadd.s32 %s51, 1
      %p55 = scmp.eq.s32.totalorder %s17, 1
      %p56 = scmp.ne.s32.totalorder %s51, %s53
      %p57 = scmp.eq.s32.totalorder %s17, 0
      %p58 = por %p56, %p57
      %p59 = scmp.ne.s32.totalorder %s51, %s53
      %p60 = scmp.eq.s32.totalorder %s22, 1
      %p61 = por %p59, %p60
      %p62 = scmp.ne.s32.totalorder %s53, %s54
      %p63 = scmp.eq.s32.totalorder %s22, 0
      %p64 = por %p62, %p63
      %p65 = scmp.ne.s32.totalorder %s53, %s54
      %p66 = scmp.eq.s32.totalorder %s23, 1
      %p67 = por %p65, %p66
      %p69 = scmp.ne.s32.totalorder %s54, %s68
      %p70 = scmp.eq.s32.totalorder %s23, 0
      %p71 = por %p69, %p70
      %s73 = sadd.s32 %s72, 1
      %p76 = scmp.eq.s32.totalorder %s17, 1
      %p77 = scmp.ne.s32.totalorder %s72, %s74
      %p78 = scmp.eq.s32.totalorder %s17, 0
      %p79 = por %p77, %p78
      %p80 = scmp.ne.s32.totalorder %s72, %s74
      %p81 = scmp.eq.s32.totalorder %s22, 1
      %p82 = por %p80, %p81
      %p83 = scmp.ne.s32.totalorder %s74, %s75
      %p84 = scmp.eq.s32.totalorder %s22, 0
      %p85 = por %p83, %p84
      %p86 = scmp.ne.s32.totalorder %s74, %s75
      %p87 = scmp.eq.s32.totalorder %s23, 1
      %p88 = por %p86, %p87
      %p90 = scmp.ne.s32.totalorder %s75, %s89
      %p91 = scmp.eq.s32.totalorder %s23, 0
      %p92 = por %p90, %p91
      %s94 = sadd.s32 %s93, 1
      %p97 = scmp.eq.s32.totalorder %s17, 1
      %p98 = scmp.ne.s32.totalorder %s93, %s95
      %p99 = scmp.eq.s32.totalorder %s17, 0
      %p100 = por %p98, %p99
      %p101 = scmp.ne.s32.totalorder %s93, %s95
      %p102 = scmp.eq.s32.totalorder %s22, 1
      %p103 = por %p101, %p102
      %p104 = scmp.ne.s32.totalorder %s95, %s96
      %p105 = scmp.eq.s32.totalorder %s22, 0
      %p106 = por %p104, %p105
      %p107 = scmp.ne.s32.totalorder %s95, %s96
      %p108 = scmp.eq.s32.totalorder %s23, 1
      %p109 = por %p107, %p108
      %p111 = scmp.ne.s32.totalorder %s96, %s110
      %p112 = scmp.eq.s32.totalorder %s23, 0
      %p113 = por %p111, %p112
      %s115 = sadd.s32 %s114, 1
      %p118 = scmp.eq.s32.totalorder %s17, 1
      %p119 = scmp.ne.s32.totalorder %s114, %s116
      %p120 = scmp.eq.s32.totalorder %s17, 0
      %p121 = por %p119, %p120
      %p122 = scmp.ne.s32.totalorder %s114, %s116
      %p123 = scmp.eq.s32.totalorder %s22, 1
      %p124 = por %p122, %p123
      %p125 = scmp.ne.s32.totalorder %s116, %s117
      %p126 = scmp.eq.s32.totalorder %s22, 0
      %p127 = por %p125, %p126
      %p128 = scmp.ne.s32.totalorder %s116, %s117
      %p129 = scmp.eq.s32.totalorder %s23, 1
      %p130 = por %p128, %p129
      %p132 = scmp.ne.s32.totalorder %s117, %s131
      %p133 = scmp.eq.s32.totalorder %s23, 0
      %p134 = por %p132, %p133
      %s135 = ssub.s32 %s17, %s24
      %p136 = scmp.eq.s32.totalorder %s135, 0
      %s138 = sadd.s32 %s137, 1
      %s139 = scalar_select %p136, %s137, %s138
      %p142 = pneg %p136
      %p143 = scmp.eq.s32.totalorder %s17, 1
      %p144 = por %p142, %p143
      %p145 = scmp.ne.s32.totalorder %s137, %s140
      %p146 = scmp.eq.s32.totalorder %s17, 0
      %p147 = por %p145, %p146
      %p148 = scmp.ne.s32.totalorder %s137, %s140
      %p149 = scmp.eq.s32.totalorder %s22, 1
      %p150 = por %p148, %p149
      %p151 = scmp.ne.s32.totalorder %s140, %s141
      %p152 = scmp.eq.s32.totalorder %s22, 0
      %p153 = por %p151, %p152
      %p154 = scmp.ne.s32.totalorder %s140, %s141
      %p155 = scmp.eq.s32.totalorder %s23, 1
      %p156 = por %p154, %p155
      %p158 = scmp.ne.s32.totalorder %s141, %s157
      %p159 = scmp.eq.s32.totalorder %s23, 0
      %p160 = por %p158, %p159
      %p161 = scmp.le.s32.totalorder 1, %s17
      %p162 = scmp.lt.s32.totalorder %s17, 3
      %p163 = pnand %p161, %p162
      %p164 = pneg %p163
      // Predicated region
      $region9: #{tpu_custom_call.1} parent=5 // pred_check
        _
      $region10: #{tpu_custom_call.1} parent=5 // pred_check_branch
        %166 = sbr.rel (%p163) target = $region12
      $region11: #{tpu_custom_call.1} parent=5 // pred_region
        %s167 = ssub.s32 %s17, 1
        // Predicated region
        $region13: #{tpu_custom_call.1} parent=11 // pred_check
          %p168 = pneg %p64
        $region14: #{tpu_custom_call.1} parent=11 // pred_check_branch
          %170 = sbr.rel (%p168) target = $region16
        $region15: #{tpu_custom_call.1} parent=11 // pred_region
          _
        $region16: #{tpu_custom_call.1} parent=11 // pred_fallthru
          _
        // Predicated region
        $region17: #{tpu_custom_call.1} parent=11 // pred_check
          %p171 = pneg %p85
        $region18: #{tpu_custom_call.1} parent=11 // pred_check_branch
          %173 = sbr.rel (%p171) target = $region20
        $region19: #{tpu_custom_call.1} parent=11 // pred_region
          _
        $region20: #{tpu_custom_call.1} parent=11 // pred_fallthru
          _
        // Predicated region
        $region21: #{tpu_custom_call.1} parent=11 // pred_check
          %p174 = pneg %p106
        $region22: #{tpu_custom_call.1} parent=11 // pred_check_branch
          %176 = sbr.rel (%p174) target = $region24
        $region23: #{tpu_custom_call.1} parent=11 // pred_region
          _
        $region24: #{tpu_custom_call.1} parent=11 // pred_fallthru
          _
        // Predicated region
        $region25: #{tpu_custom_call.1} parent=11 // pred_check
          %p177 = pneg %p127
        $region26: #{tpu_custom_call.1} parent=11 // pred_check_branch
          %179 = sbr.rel (%p177) target = $region28
        $region27: #{tpu_custom_call.1} parent=11 // pred_region
          _
        $region28: #{tpu_custom_call.1} parent=11 // pred_fallthru
          _
      $region12: #{tpu_custom_call.1} parent=5 // pred_fallthru
        _
      %p180 = scmp.lt.s32.totalorder %s17, 2
      // Predicated region
      $region29: #{tpu_custom_call.1} parent=5 // pred_check
        %p181 = pneg %p180
      $region30: #{tpu_custom_call.1} parent=5 // pred_check_branch
        %183 = sbr.rel (%p181) target = $region32
      $region31: #{tpu_custom_call.1} parent=5 // pred_region
        // Predicated region
        $region33: #{tpu_custom_call.1} parent=31 // pred_check
          %p184 = pneg %p37
        $region34: #{tpu_custom_call.1} parent=31 // pred_check_branch
          %186 = sbr.rel (%p184) target = $region36
        $region35: #{tpu_custom_call.1} parent=31 // pred_region
          %s187 = sand.u32 %s27, 1
          %s188 = scalar_lea.sflag [#allocation3], %s187
          %s189 = sand.u32 %s27, 1
          %s190 = smul.addr %s189, 64
          %s191 = scalar_lea.vmem [#allocation2], %s190
          %193 = vsyncadd %s188, 0
          %s194 = smul.addr %s17, 8
          %s195 = smul.addr %s194, 8
          %s196 = scalar_lea.hbm %s0, %s195
          %s197 = sshll.u32 %s196, 4
          %s198 = int_to_ptr.hbm [resolvable:$true] %s197
          %s199 = sshll.u32 %s191, 4
          %s200 = int_to_ptr.vmem [resolvable:$true] %s199
          %205 = dma.hbm_to_vmem [thread:$0]  %s198, 1024, %s200, %s188, 256, 256, 16
        $region36: #{tpu_custom_call.1} parent=31 // pred_fallthru
          _
      $region32: #{tpu_custom_call.1} parent=5 // pred_fallthru
        _
      %p206 = scmp.le.s32.totalorder 1, %s17
      %p207 = scmp.lt.s32.totalorder %s17, 3
      %p208 = pnand %p206, %p207
      %p209 = pneg %p208
      // Predicated region
      $region37: #{tpu_custom_call.1} parent=5 // pred_check
        _
      $region38: #{tpu_custom_call.1} parent=5 // pred_check_branch
        %211 = sbr.rel (%p208) target = $region40
      $region39: #{tpu_custom_call.1} parent=5 // pred_region
        %s212 = ssub.s32 %s17, 1
        %s213 = sand.u32 %s30, 1
        %s214 = scalar_lea.sflag [#allocation3], %s213
        %s215 = sand.u32 %s30, 1
        %s216 = smul.addr %s215, 64
        %s217 = scalar_lea.vmem [#allocation2], %s216
        // Predicated region
        $region41: #{tpu_custom_call.1} parent=39 // pred_check
          %p218 = pneg %p43
        $region42: #{tpu_custom_call.1} parent=39 // pred_check_branch
          %220 = sbr.rel (%p218) target = $region44
        $region43: #{tpu_custom_call.1} parent=39 // pred_region
          %222 = dma.done %s214, 1024
        $region44: #{tpu_custom_call.1} parent=39 // pred_fallthru
          _
        %s223 = sand.u32 %s30, 1
        %s224 = scalar_lea.sflag [#allocation3], %s223
        %s225 = sand.u32 %s30, 1
        %s226 = smul.addr %s225, 64
        %s227 = scalar_lea.vmem [#allocation2], %s226
        %p228 = pneg %p43
        %p229 = pneg %p40
        %p230 = pneg %p64
        %p231 = pneg %p61
        %p232 = pneg %p85
        %p233 = pneg %p82
        %p234 = pneg %p106
        %p235 = pneg %p103
        %p236 = pneg %p127
        %p237 = pneg %p124
        %p238 = pneg %p153
        %p239 = pneg %p150
        %s240 = sand.u32 %s140, 1
        %s241 = scalar_lea.sflag [#allocation4], %s240
        %s242 = sand.u32 %s140, 1
        %s243 = smul.addr %s242, 64
        %s244 = scalar_lea.vmem [#allocation5], %s243
        %v245 = vld [vmem:[%s217] sm:$0xff]
        %v246 = vld [vmem:[%s217 + $0x8] sm:$0xff]
        %v247 = vld [vmem:[%s217 + $0x10] sm:$0xff]
        %v248 = vld [vmem:[%s217 + $0x18] sm:$0xff]
        %v249 = vld [vmem:[%s217 + $0x20] sm:$0xff]
        %v250 = vld [vmem:[%s217 + $0x28] sm:$0xff]
        %v251 = vld [vmem:[%s217 + $0x30] sm:$0xff]
        %v252 = vld [vmem:[%s217 + $0x38] sm:$0xff]
        %v253 = vadd.f32 %v245, %v246
        %254 = vadd.xlane.f32.xlu0 %v253
        %v255 = vpop.xlane.xlu0 %254
        %v256 = vadd.f32 %v247, %v248
        %257 = vadd.xlane.f32.xlu0 %v256
        %v258 = vpop.xlane.xlu0 %257
        %v259 = vadd.f32 %v249, %v250
        %260 = vadd.xlane.f32.xlu0 %v259
        %v261 = vpop.xlane.xlu0 %260
        %v262 = vadd.f32 %v251, %v252
        %263 = vadd.xlane.f32.xlu0 %v262
        %v264 = vpop.xlane.xlu0 %263
        %v265 = vmul.f32 %v255, 0.00390625
        %v266 = vmul.f32 %v258, 0.00390625
        %v267 = vmul.f32 %v261, 0.00390625
        %v268 = vmul.f32 %v264, 0.00390625
        %v269 = vld [vmem:[%s1] sm:$0xf]
        %v274 = vlaneseq
        %v275 = vand.u32 %v274, 127
        %v276 = vperm.slane %v265, %v275
        %v277 = vadd.s32 %v275, 4294967288
        %v278 = vperm.slane %v266, %v277
        %vm279 = vcmask 130112
        %v280 = vsel %vm279, %v278, %v276
        %v281 = vadd.s32 %v275, 4294967280
        %v282 = vperm.slane %v267, %v281
        %vm283 = vcmask 195712
        %v284 = vsel %vm283, %v282, %v280
        %v285 = vadd.s32 %v275, 4294967272
        %v286 = vperm.slane %v268, %v285
        %vm287 = vcmask 261312
        %v288 = vsel %vm287, %v286, %v284
        %vm289 = vcmask 1042434
        %v290 = vsel %vm289, %v288, %v288
        %vm291 = vcmask 1043459
        %v292 = vsel %vm291, %v288, %v290
        %v294 = vmul.f32 %v269, %v292
        %vm295 = vcmask 257024
        %v296 = vsel %vm295, %v294, 0.0
        %297 = vadd.xlane.f32.xlu0 %v296
        %v298 = vpop.xlane.xlu0 %297
        %v299 = vld [vmem:[%s2] sm:$0xf]
        %v300 = vadd.f32 %v298, %v299
        %v301 = vmax.f32 %v300, 0.0
        %v302 = vld [vmem:[%s3] sm:$0xff]
        %v303 = vld [vmem:[%s3 + $0x8] sm:$0xff]
        %v304 = vld [vmem:[%s3 + $0x10] sm:$0xff]
        %v305 = vld [vmem:[%s3 + $0x18] sm:$0xff]
        %307 = vset.pattern.permute.xlu0 0
        %308 = vperm.xlu0 %307, %v301
        %v309 = vpop.permute.xlu0 %308
        %v310 = vperm.slane %v309, %v275
        %v311 = vsel %vm289, %v310, %v310
        %v312 = vsel %vm291, %v310, %v311
        %vm313 = vcmask 1044484
        %v314 = vsel %vm313, %v310, %v312
        %vm315 = vcmask 1045509
        %v316 = vsel %vm315, %v310, %v314
        %vm317 = vcmask 1046534
        %v318 = vsel %vm317, %v310, %v316
        %vm319 = vcmask 1047559
        %v320 = vsel %vm319, %v310, %v318
        %v322 = vmul.f32 %v302, %v320
        %v323 = vmul.f32 %v303, %v320
        %v324 = vmul.f32 %v304, %v320
        %v325 = vmul.f32 %v305, %v320
        %vm326 = vcmask 31744
        %v327 = vsel %vm326, %v322, 0.0
        %328 = vadd.xlane.f32.xlu0 %v327
        %v329 = vpop.xlane.xlu0 %328
        %v330 = vsel %vm326, %v323, 0.0
        %331 = vadd.xlane.f32.xlu0 %v330
        %v332 = vpop.xlane.xlu0 %331
        %v333 = vsel %vm326, %v324, 0.0
        %334 = vadd.xlane.f32.xlu0 %v333
        %v335 = vpop.xlane.xlu0 %334
        %v336 = vsel %vm326, %v325, 0.0
        %337 = vadd.xlane.f32.xlu0 %v336
        %v338 = vpop.xlane.xlu0 %337
        %v339 = vld [vmem:[%s4] sm:$0xff]
        %v340 = vld [vmem:[%s4 + $0x8] sm:$0xff]
        %v341 = vld [vmem:[%s4 + $0x10] sm:$0xff]
        %v342 = vld [vmem:[%s4 + $0x18] sm:$0xff]
        %v343 = vadd.f32 %v329, %v339
        %v344 = vadd.f32 %v332, %v340
        %v345 = vadd.f32 %v335, %v341
        %v346 = vadd.f32 %v338, %v342
        %v347 = vxor.u32 %v343, 2147483648
        %v348 = vxor.u32 %v344, 2147483648
        %v349 = vxor.u32 %v345, 2147483648
        %v350 = vxor.u32 %v346, 2147483648
        %v351 = vmul.f32 %v347, 1.442695
        %v352 = vpow.pop %v351
        %v353 = vmul.f32 %v348, 1.442695
        %v354 = vpow.pop %v353
        %v355 = vmul.f32 %v349, 1.442695
        %v356 = vpow.pop %v355
        %v357 = vmul.f32 %v350, 1.442695
        %v358 = vpow.pop %v357
        %v359 = vadd.f32 %v352, 1.0
        %v360 = vadd.f32 %v354, 1.0
        %v361 = vadd.f32 %v356, 1.0
        %v362 = vadd.f32 %v358, 1.0
        %v363 = vrcp.pop %v359
        %v364 = vmul.f32 %v359, %v363
        %v365 = vsub.f32 1.0, %v364
        %v366 = vmul.f32 %v363, %v365
        %v367 = vadd.f32 %v363, %v366
        %vm368 = vweird.f32 %v359
        %vm369 = vweird.f32 %v363
        %vm370 = vmor %vm368, %vm369
        %v371 = vsel %vm370, %v363, %v367
        %v372 = vand.u32 2147483647, %v359
        %vm373 = vcmp.eq.f32.partialorder %v372, 8.507059e+37
        %v374 = vand.u32 %v359, 2147483648
        %v375 = vor.u32 1.1754944e-38, %v374
        %v376 = vsel %vm373, %v375, %v371
        %v377 = vmul.f32 1.0, %v376
        %v378 = vrcp.pop %v360
        %v379 = vmul.f32 %v360, %v378
        %v380 = vsub.f32 1.0, %v379
        %v381 = vmul.f32 %v378, %v380
        %v382 = vadd.f32 %v378, %v381
        %vm383 = vweird.f32 %v360
        %vm384 = vweird.f32 %v378
        %vm385 = vmor %vm383, %vm384
        %v386 = vsel %vm385, %v378, %v382
        %v387 = vand.u32 2147483647, %v360
        %vm388 = vcmp.eq.f32.partialorder %v387, 8.507059e+37
        %v389 = vand.u32 %v360, 2147483648
        %v390 = vor.u32 1.1754944e-38, %v389
        %v391 = vsel %vm388, %v390, %v386
        %v392 = vmul.f32 1.0, %v391
        %v393 = vrcp.pop %v361
        %v394 = vmul.f32 %v361, %v393
        %v395 = vsub.f32 1.0, %v394
        %v396 = vmul.f32 %v393, %v395
        %v397 = vadd.f32 %v393, %v396
        %vm398 = vweird.f32 %v361
        %vm399 = vweird.f32 %v393
        %vm400 = vmor %vm398, %vm399
        %v401 = vsel %vm400, %v393, %v397
        %v402 = vand.u32 2147483647, %v361
        %vm403 = vcmp.eq.f32.partialorder %v402, 8.507059e+37
        %v404 = vand.u32 %v361, 2147483648
        %v405 = vor.u32 1.1754944e-38, %v404
        %v406 = vsel %vm403, %v405, %v401
        %v407 = vmul.f32 1.0, %v406
        %v408 = vrcp.pop %v362
        %v409 = vmul.f32 %v362, %v408
        %v410 = vsub.f32 1.0, %v409
        %v411 = vmul.f32 %v408, %v410
        %v412 = vadd.f32 %v408, %v411
        %vm413 = vweird.f32 %v362
        %vm414 = vweird.f32 %v408
        %vm415 = vmor %vm413, %vm414
        %v416 = vsel %vm415, %v408, %v412
        %v417 = vand.u32 2147483647, %v362
        %vm418 = vcmp.eq.f32.partialorder %v417, 8.507059e+37
        %v419 = vand.u32 %v362, 2147483648
        %v420 = vor.u32 1.1754944e-38, %v419
        %v421 = vsel %vm418, %v420, %v416
        %v422 = vmul.f32 1.0, %v421
        %424 = vset.pattern.permute.xlu0 0
        %425 = vperm.xlu0 %424, %v377
        %v426 = vpop.permute.xlu0 %425
        %429 = vset.pattern.permute.xlu0 0
        %430 = vperm.xlu0 %429, %v392
        %v431 = vpop.permute.xlu0 %430
        %434 = vset.pattern.permute.xlu0 0
        %435 = vperm.xlu0 %434, %v407
        %v436 = vpop.permute.xlu0 %435
        %439 = vset.pattern.permute.xlu0 0
        %440 = vperm.xlu0 %439, %v422
        %v441 = vpop.permute.xlu0 %440
        %v443 = vmul.f32 %v245, %v426
        %v444 = vmul.f32 %v246, %v426
        %v445 = vmul.f32 %v247, %v431
        %v446 = vmul.f32 %v248, %v431
        %v447 = vmul.f32 %v249, %v436
        %v448 = vmul.f32 %v250, %v436
        %v449 = vmul.f32 %v251, %v441
        %v450 = vmul.f32 %v252, %v441
        %451 = vst [vmem:[%s244] sm:$0xff] %v443
        %452 = vst [vmem:[%s244 + $0x8] sm:$0xff] %v444
        %453 = vst [vmem:[%s244 + $0x10] sm:$0xff] %v445
        %454 = vst [vmem:[%s244 + $0x18] sm:$0xff] %v446
        %455 = vst [vmem:[%s244 + $0x20] sm:$0xff] %v447
        %456 = vst [vmem:[%s244 + $0x28] sm:$0xff] %v448
        %457 = vst [vmem:[%s244 + $0x30] sm:$0xff] %v449
        %458 = vst [vmem:[%s244 + $0x38] sm:$0xff] %v450
        %s459 = sand.u32 %s140, 1
        %s460 = scalar_lea.sflag [#allocation4], %s459
        %s461 = sand.u32 %s140, 1
        %s462 = smul.addr %s461, 64
        %s463 = scalar_lea.vmem [#allocation5], %s462
        // Predicated region
        $region45: #{tpu_custom_call.1} parent=39 // pred_check
          %p464 = pneg %p150
        $region46: #{tpu_custom_call.1} parent=39 // pred_check_branch
          %466 = sbr.rel (%p464) target = $region48
        $region47: #{tpu_custom_call.1} parent=39 // pred_region
          %468 = vsyncadd %s460, 0
          %s469 = smul.addr %s22, 8
          %s470 = smul.addr %s469, 8
          %s471 = scalar_lea.hbm %s5, %s470
          %s472 = sshll.u32 %s463, 4
          %s473 = int_to_ptr.vmem [resolvable:$true] %s472
          %s474 = sshll.u32 %s471, 4
          %s475 = int_to_ptr.hbm [resolvable:$true] %s474
          %480 = dma.vmem_to_hbm [thread:$0]  %s473, 1024, %s475, %s460, 256, 256, 16
        $region48: #{tpu_custom_call.1} parent=39 // pred_fallthru
          _
      $region40: #{tpu_custom_call.1} parent=5 // pred_fallthru
        _
      %p481 = scmp.le.s32.totalorder 2, %s17
      // Predicated region
      $region49: #{tpu_custom_call.1} parent=5 // pred_check
        %p482 = pneg %p481
      $region50: #{tpu_custom_call.1} parent=5 // pred_check_branch
        %484 = sbr.rel (%p482) target = $region52
      $region51: #{tpu_custom_call.1} parent=5 // pred_region
        %s485 = ssub.s32 %s17, 2
        // Predicated region
        $region53: #{tpu_custom_call.1} parent=51 // pred_check
          %p486 = pneg %p156
        $region54: #{tpu_custom_call.1} parent=51 // pred_check_branch
          %488 = sbr.rel (%p486) target = $region56
        $region55: #{tpu_custom_call.1} parent=51 // pred_region
          %s489 = sand.u32 %s141, 1
          %s490 = scalar_lea.sflag [#allocation4], %s489
          %s491 = sand.u32 %s141, 1
          %s492 = smul.addr %s491, 64
          %s493 = scalar_lea.vmem [#allocation5], %s492
          %495 = dma.done %s490, 1024
        $region56: #{tpu_custom_call.1} parent=51 // pred_fallthru
          _
      $region52: #{tpu_custom_call.1} parent=5 // pred_fallthru
        _
    $region6: #{tpu_custom_call.1} parent=1 // loop_footer
      %s21 = sadd.s32 1, %s17
    $region7: #{tpu_custom_call.1} parent=1 // loop_footer_branch
      %16 = sbr.rel target = $region3
    $region8: #{tpu_custom_call.1} parent=1 // loop_exit
      _
    %496 = vsyncpa [#allocation3], 1
    %s497 = scalar_lea.sflag [#allocation3], 1
    %498 = vsyncpa %s497, 1
    %499 = vsyncpa [#allocation4], 1
    %s500 = scalar_lea.sflag [#allocation4], 1
    %501 = vsyncpa %s500, 1

</llo_original>
